<compile_context>
chip_gen: v5e
topology: v5e:2x2
jax: 0.10.0
libtpu: 0.0.40
codegen_flags: <defaults>
</compile_context>

<pallas_src>
import functools

import jax
import jax.numpy as jnp
from jax.experimental import pallas as pl
from jax.experimental.pallas import tpu as pltpu


def _gcn_block_kernel(x_ref, w_ref, b_ref, bd_ref, cb_ref, out_ref, *,
                      num_adj, dout):
    # x_ref  : (R, Din)       f32   R = TILE_B*N flattened (batch, hero) rows
    # w_ref  : (Din, A*Dout)  bf16  concatenated linear weights
    # b_ref  : (1, A*Dout)    f32   concatenated linear biases
    # bd_ref : (A, R, R)      bf16  kron(I_TILE_B, conv_w[a] * adj_norm[a])
    # cb_ref : (1,)           f32   SMEM, 1x1-conv bias
    # out_ref: (R, Dout)      f32
    x = x_ref[...].astype(jnp.bfloat16)
    h = jnp.dot(x, w_ref[...], preferred_element_type=jnp.float32)  # (R, A*Dout)
    h = jnp.maximum(h + b_ref[...], 0.0)                            # bias+ReLU, f32

    acc = None
    for a in range(num_adj):                                        # static unroll
        h_a = h[:, a * dout:(a + 1) * dout].astype(jnp.bfloat16)    # (R, Dout)
        part = jnp.dot(bd_ref[a], h_a, preferred_element_type=jnp.float32)
        acc = part if acc is None else acc + part
    out_ref[...] = (acc + cb_ref[0]).astype(out_ref.dtype)


def gcn_block(draft, weights, biases, adj, conv_w, conv_b, *, tile_b=16):
    """Pallas forward pass of GraphConvolutionBlock.

    draft:   (B, N, Din) f32
    weights: (A, Din, Dout)  linear weights pre-transposed (h = x @ W[a] + b[a])
    biases:  (A, Dout)
    adj:     (A, N, N)       raw adjacency matrices (normalized here)
    conv_w:  (A,)            Conv2d(A, 1, 1) weight (squeezed)
    conv_b:  (1,)            Conv2d bias
    returns: (B, N, Dout)
    """
    B, N, Din = draft.shape
    A, _, Dout = weights.shape
    f32 = jnp.float32

    # ---- host-side preprocessing (one-time layout plumbing) -----------------
    # torch F.normalize(adj_2d, p=1, dim=1) == divide each row by its L1 norm.
    adj_n = adj / jnp.maximum(jnp.sum(jnp.abs(adj), axis=-1, keepdims=True), 1e-12)
    adj_scaled = conv_w[:, None, None].astype(f32) * adj_n          # fold 1x1 conv

    tile_b = max(1, min(tile_b, B))
    n_tiles = -(-B // tile_b)
    b_pad = n_tiles * tile_b
    if b_pad != B:  # pad batch so every grid step is a full tile; sliced off below
        draft = jnp.concatenate(
            [draft, jnp.zeros((b_pad - B, N, Din), draft.dtype)], axis=0)
    r = tile_b * N

    x_flat = draft.reshape(b_pad * N, Din)                          # (B_pad*N, Din)
    w_cat = jnp.swapaxes(weights, 0, 1).reshape(Din, A * Dout).astype(jnp.bfloat16)
    b_cat = biases.reshape(1, A * Dout).astype(f32)

    # Batched aggregation as block-diagonal matmuls: kron(I_tile_b, adj_scaled[a]).
    eye = jnp.eye(tile_b, dtype=f32)
    bd = jnp.einsum("bc,anm->abncm", eye, adj_scaled).reshape(A, r, r)
    bd = bd.astype(jnp.bfloat16)

    conv_b = conv_b.astype(f32)

    flops = 2 * B * A * (N * Din * Dout + N * N * Dout)
    bytes_accessed = int(
        x_flat.size * x_flat.dtype.itemsize + w_cat.size * 2 + b_cat.size * 4 +
        bd.size * 2 + conv_b.size * 4 + b_pad * N * Dout * draft.dtype.itemsize)

    kernel = functools.partial(_gcn_block_kernel, num_adj=A, dout=Dout)
    out_flat = pl.pallas_call(
        kernel,
        out_shape=jax.ShapeDtypeStruct((b_pad * N, Dout), draft.dtype),
        grid=(n_tiles,),
        in_specs=[
            pl.BlockSpec((r, Din), lambda i: (i, 0)),               # batch-tile rows
            pl.BlockSpec((Din, A * Dout), lambda i: (0, 0)),        # W_cat (resident)
            pl.BlockSpec((1, A * Dout), lambda i: (0, 0)),          # b_cat
            pl.BlockSpec((A, r, r), lambda i: (0, 0, 0)),           # block-diag adj
            pl.BlockSpec(memory_space=pltpu.MemorySpace.SMEM),      # conv bias
        ],
        out_specs=pl.BlockSpec((r, Dout), lambda i: (i, 0)),
        compiler_params=pltpu.CompilerParams(
            dimension_semantics=("parallel",)),
        cost_estimate=pl.CostEstimate(
            flops=flops, transcendentals=0, bytes_accessed=bytes_accessed),
    )(x_flat, w_cat, b_cat, bd, conv_b)

    return out_flat.reshape(b_pad, N, Dout)[:B]


if __name__ == "__main__":
    B, N, Din, Dout, A = 32, 10, 16, 32, 3

    key = jax.random.PRNGKey(0)
    k = jax.random.split(key, 6)

    draft = jax.random.normal(k[0], (B, N, Din), jnp.float32)
    weights = jax.random.normal(k[1], (A, Din, Dout), jnp.float32) * 0.1
    biases = jax.random.normal(k[2], (A, Dout), jnp.float32) * 0.1
    adj = jax.random.uniform(k[3], (A, N, N), jnp.float32)
    conv_w = jax.random.normal(k[4], (A,), jnp.float32)   # Conv2d(A,1,1) weight
    conv_b = jax.random.normal(k[5], (1,), jnp.float32)   # Conv2d bias

    out = gcn_block(draft, weights, biases, adj, conv_w, conv_b, tile_b=16)
    out = jax.block_until_ready(out)

    # Pure-JAX reference, mirroring the kernel's bf16 parameter/activation
    # rounding (accumulation is f32 in both paths).
    bf = jnp.bfloat16
    adj_n = adj / jnp.maximum(jnp.sum(jnp.abs(adj), axis=-1, keepdims=True), 1e-12)
    adj_s = (conv_w[:, None, None] * adj_n).astype(bf).astype(jnp.float32)
    xb = draft.astype(bf).astype(jnp.float32)
    wb = weights.astype(bf).astype(jnp.float32)
    h = jnp.maximum(
        jnp.einsum("bnd,ado->bano", xb, wb) + biases[None, :, None, :], 0.0)
    hb = h.astype(bf).astype(jnp.float32)
    ref = jnp.einsum("anm,bamo->bno", adj_s, hb) + conv_b[0]

    assert out.shape == (B, N, Dout)
    assert jnp.allclose(out, ref, atol=2e-2, rtol=2e-2), "mismatch vs reference"

    print("KERNEL_OK")
</pallas_src>

<mosaic_0001>
module attributes {stable_mosaic.version = 11 : i64} {
  func.func @_gcn_block_kernel(%arg0: i32, %arg1: memref<160x16xf32, #tpu.memory_space<vmem>>, %arg2: memref<16x96xbf16, #tpu.memory_space<vmem>>, %arg3: memref<1x96xf32, #tpu.memory_space<vmem>>, %arg4: memref<3x160x160xbf16, #tpu.memory_space<vmem>>, %arg5: memref<1xf32, #tpu.memory_space<smem>>, %arg6: memref<160x32xf32, #tpu.memory_space<vmem>>) attributes {dimension_semantics = [#tpu.dimension_semantics<parallel>], iteration_bounds = array<i64: 2>, scalar_prefetch = 0 : i64, scratch_operands = 0 : i64, tpu.core_type = #tpu.core_type<tc>, window_params = [{transform_indices = @transform_0, window_bounds = array<i64: 160, 16>}, {pipeline_mode = #tpu.pipeline_mode<synchronous>, transform_indices = @transform_1, window_bounds = array<i64: 16, 96>}, {pipeline_mode = #tpu.pipeline_mode<synchronous>, transform_indices = @transform_2, window_bounds = array<i64: 1, 96>}, {pipeline_mode = #tpu.pipeline_mode<synchronous>, transform_indices = @transform_3, window_bounds = array<i64: 3, 160, 160>}, {transform_indices = @transform_4, window_bounds = array<i64: 1>}, {transform_indices = @transform_5, window_bounds = array<i64: 160, 32>}]} {
    %c0 = arith.constant 0 : index
    %c0_0 = arith.constant 0 : index
    %0 = vector.load %arg1[%c0, %c0_0] : memref<160x16xf32, #tpu.memory_space<vmem>>, vector<160x16xf32>
    %1 = arith.truncf %0 : vector<160x16xf32> to vector<160x16xbf16>
    %c0_1 = arith.constant 0 : index
    %c0_2 = arith.constant 0 : index
    %2 = vector.load %arg2[%c0_1, %c0_2] : memref<16x96xbf16, #tpu.memory_space<vmem>>, vector<16x96xbf16>
    %cst = arith.constant dense<0.000000e+00> : vector<160x96xf32>
    %3 = tpu.matmul %1, %2, %cst {dimension_numbers = #tpu.dot_dimension_numbers<[1], [0], [0], [1], [0, 0, 1, 1], [], []>} : vector<160x16xbf16>, vector<16x96xbf16>, vector<160x96xf32> -> vector<160x96xf32>
    %c0_3 = arith.constant 0 : index
    %c0_4 = arith.constant 0 : index
    %4 = vector.load %arg3[%c0_3, %c0_4] : memref<1x96xf32, #tpu.memory_space<vmem>>, vector<1x96xf32>
    %5 = vector.broadcast %4 : vector<1x96xf32> to vector<160x96xf32>
    %6 = arith.addf %3, %5 : vector<160x96xf32>
    %cst_5 = arith.constant 0.000000e+00 : f32
    %7 = vector.broadcast %cst_5 : f32 to vector<160x96xf32>
    %8 = arith.maximumf %6, %7 : vector<160x96xf32>
    %9 = vector.extract_strided_slice %8 {offsets = [0, 0], sizes = [160, 32], strides = [1, 1]} : vector<160x96xf32> to vector<160x32xf32>
    %10 = arith.truncf %9 : vector<160x32xf32> to vector<160x32xbf16>
    %c0_6 = arith.constant 0 : index
    %c0_7 = arith.constant 0 : index
    %c0_8 = arith.constant 0 : index
    %11 = vector.load %arg4[%c0_6, %c0_7, %c0_8] : memref<3x160x160xbf16, #tpu.memory_space<vmem>>, vector<1x160x160xbf16>
    %12 = vector.shape_cast %11 : vector<1x160x160xbf16> to vector<160x160xbf16>
    %cst_9 = arith.constant dense<0.000000e+00> : vector<160x32xf32>
    %13 = tpu.matmul %12, %10, %cst_9 {dimension_numbers = #tpu.dot_dimension_numbers<[1], [0], [0], [1], [0, 0, 1, 1], [], []>} : vector<160x160xbf16>, vector<160x32xbf16>, vector<160x32xf32> -> vector<160x32xf32>
    %14 = vector.extract_strided_slice %8 {offsets = [0, 32], sizes = [160, 32], strides = [1, 1]} : vector<160x96xf32> to vector<160x32xf32>
    %15 = arith.truncf %14 : vector<160x32xf32> to vector<160x32xbf16>
    %c1 = arith.constant 1 : index
    %c0_10 = arith.constant 0 : index
    %c0_11 = arith.constant 0 : index
    %16 = vector.load %arg4[%c1, %c0_10, %c0_11] : memref<3x160x160xbf16, #tpu.memory_space<vmem>>, vector<1x160x160xbf16>
    %17 = vector.shape_cast %16 : vector<1x160x160xbf16> to vector<160x160xbf16>
    %cst_12 = arith.constant dense<0.000000e+00> : vector<160x32xf32>
    %18 = tpu.matmul %17, %15, %cst_12 {dimension_numbers = #tpu.dot_dimension_numbers<[1], [0], [0], [1], [0, 0, 1, 1], [], []>} : vector<160x160xbf16>, vector<160x32xbf16>, vector<160x32xf32> -> vector<160x32xf32>
    %19 = arith.addf %13, %18 : vector<160x32xf32>
    %20 = vector.extract_strided_slice %8 {offsets = [0, 64], sizes = [160, 32], strides = [1, 1]} : vector<160x96xf32> to vector<160x32xf32>
    %21 = arith.truncf %20 : vector<160x32xf32> to vector<160x32xbf16>
    %c2 = arith.constant 2 : index
    %c0_13 = arith.constant 0 : index
    %c0_14 = arith.constant 0 : index
    %22 = vector.load %arg4[%c2, %c0_13, %c0_14] : memref<3x160x160xbf16, #tpu.memory_space<vmem>>, vector<1x160x160xbf16>
    %23 = vector.shape_cast %22 : vector<1x160x160xbf16> to vector<160x160xbf16>
    %cst_15 = arith.constant dense<0.000000e+00> : vector<160x32xf32>
    %24 = tpu.matmul %23, %21, %cst_15 {dimension_numbers = #tpu.dot_dimension_numbers<[1], [0], [0], [1], [0, 0, 1, 1], [], []>} : vector<160x160xbf16>, vector<160x32xbf16>, vector<160x32xf32> -> vector<160x32xf32>
    %25 = arith.addf %19, %24 : vector<160x32xf32>
    %c0_16 = arith.constant 0 : index
    %26 = memref.load %arg5[%c0_16] : memref<1xf32, #tpu.memory_space<smem>>
    %27 = vector.broadcast %26 : f32 to vector<160x32xf32>
    %28 = arith.addf %25, %27 : vector<160x32xf32>
    %c0_17 = arith.constant 0 : index
    %c0_18 = arith.constant 0 : index
    %29 = vector.load %arg6[%c0_17, %c0_18] : memref<160x32xf32, #tpu.memory_space<vmem>>, vector<160x32xf32>
    tpu.vector_store %arg6[%c0_17, %c0_18], %28 {strides = array<i32>} : memref<160x32xf32, #tpu.memory_space<vmem>>, vector<160x32xf32>,
    return
  }
  func.func @transform_0(%arg0: i32) -> (i32, i32) {
    %c0_i32 = arith.constant 0 : i32
    %c0_i32_0 = arith.constant 0 : i32
    return %arg0, %c0_i32 : i32, i32
  }
  func.func @transform_1(%arg0: i32) -> (i32, i32) {
    %c0_i32 = arith.constant 0 : i32
    %c0_i32_0 = arith.constant 0 : i32
    %c0_i32_1 = arith.constant 0 : i32
    return %c0_i32, %c0_i32_0 : i32, i32
  }
  func.func @transform_2(%arg0: i32) -> (i32, i32) {
    %c0_i32 = arith.constant 0 : i32
    %c0_i32_0 = arith.constant 0 : i32
    %c0_i32_1 = arith.constant 0 : i32
    return %c0_i32, %c0_i32_0 : i32, i32
  }
  func.func @transform_3(%arg0: i32) -> (i32, i32, i32) {
    %c0_i32 = arith.constant 0 : i32
    %c0_i32_0 = arith.constant 0 : i32
    %c0_i32_1 = arith.constant 0 : i32
    %c0_i32_2 = arith.constant 0 : i32
    return %c0_i32, %c0_i32_0, %c0_i32_1 : i32, i32, i32
  }
  func.func @transform_4(%arg0: i32) -> i32 {
    %c0_i32 = arith.constant 0 : i32
    %c0_i32_0 = arith.constant 0 : i32
    return %c0_i32 : i32
  }
  func.func @transform_5(%arg0: i32) -> (i32, i32) {
    %c0_i32 = arith.constant 0 : i32
    %c0_i32_0 = arith.constant 0 : i32
    return %arg0, %c0_i32 : i32, i32
  }
}

</mosaic_0001>

<llo_original>
// kernel: tpu_custom_call.1
$region0: #{tpu_custom_call.1}
  #allocation0 [shape = 'u32[]', space=smem, size = 0x4, offset = 0x4, fixed_abs, tag = 'smem constant byte address 0x4 - core index']
  #allocation1 [shape = 'u32[72,128]{1,0:T(1,128)}', space=vmem, size = 0x9000, scoped, tag = 'internal scratch']
  #allocation2 [shape = 'f32[1]{0:T(128)S(6)}', space=smem, size = 0x200, scoped, tag = 'scoped memory for tpu_custom_call.1']
  %s0 = inlined_call_operand.vmem [shape: f32[320,16], index: 0, kind: input, shape index: {}]
  %s1 = inlined_call_operand.vmem [shape: bf16[16,96], index: 1, kind: input, shape index: {}]
  %s2 = inlined_call_operand.vmem [shape: f32[1,96], index: 2, kind: input, shape index: {}]
  %s3 = inlined_call_operand.hbm [shape: bf16[3,160,160], index: 3, kind: input, shape index: {}]
  %s4 = inlined_call_operand.<no memory space> [shape: f32[1], index: 4, kind: input, shape index: {}]
  %s5 = inlined_call_operand.vmem [shape: f32[320,32], index: 5, kind: output, shape index: {}]
  %s6 = sld [smem:[#allocation0]]
  $region57: #{tpu_custom_call.1} parent=0
    _
  %s8 = ssub.s32 1, %s6
  %s9 = scalar_select 0, %s8, %s6
  %10 = sst [smem:[#allocation2]] %s4
  $region1: #{tpu_custom_call.1} parent=0
    #allocation3 [shape = 'u8[245760]{0}', space=vmem, size = 0x3c000, scoped, tag = 'input window, operand 3, single buffered']
    #allocation4 [shape = 's32[2]{0}', space=sflag, size = 0x8, scoped, tag = 'scoped memory for tpu_custom_call.1']
    %11 = vsyncpa [#allocation4], 0
    loop: start=0, step=1, limit=4
    $region2: #{tpu_custom_call.1} parent=1 // loop_pre_header
      _
    $region3: #{tpu_custom_call.1} parent=1 // loop_header
      %s13 = sphi 0, %s17
      %p14 = scmp.ge.s32.totalorder %s13, 4
      %s23 = sphi 0, %s25
      %s26 = sphi 0, %s23
      %s27 = sphi 0, %s26
      %s43 = sphi 0, %s27
      %s47 = sphi 0, %s47
      %s49 = sphi 0, %s47
      %s50 = sphi 0, %s49
      %s64 = sphi 0, %s50
      %s68 = sphi 0, %s68
      %s70 = sphi 0, %s68
      %s71 = sphi 0, %s70
      %s85 = sphi 0, %s71
      %s89 = sphi 0, %s89
      %s91 = sphi 0, %s89
      %s92 = sphi 0, %s91
      %s106 = sphi 0, %s92
      %s110 = sphi 0, %s110
      %s112 = sphi 0, %s110
      %s113 = sphi 0, %s112
      %s127 = sphi 0, %s113
      %s133 = sphi 0, %s135
      %s136 = sphi 0, %s133
      %s137 = sphi 0, %s136
      %s153 = sphi 0, %s137
    $region4: #{tpu_custom_call.1} parent=1 // loop_header_branch
      %16 = sbr.rel (%p14) target = $region8
    $region5: #{tpu_custom_call.1} parent=1 // loop_body
      %s18 = ssub.s32 %s13, 1
      %s19 = ssub.s32 %s13, 2
      %s20 = sadd.s32 %s13, 1
      %s21 = ssub.s32 %s13, %s20
      %p22 = scmp.eq.s32.totalorder %s21, 0
      %s24 = sadd.s32 %s23, 1
      %s25 = scalar_select %p22, %s23, %s24
      %p28 = pneg %p22
      %p29 = scmp.eq.s32.totalorder %s13, 1
      %p30 = por %p28, %p29
      %p31 = scmp.ne.s32.totalorder %s23, %s26
      %p32 = scmp.eq.s32.totalorder %s13, 0
      %p33 = por %p31, %p32
      %p34 = scmp.ne.s32.totalorder %s23, %s26
      %p35 = scmp.eq.s32.totalorder %s18, 1
      %p36 = por %p34, %p35
      %p37 = scmp.ne.s32.totalorder %s26, %s27
      %p38 = scmp.eq.s32.totalorder %s18, 0
      %p39 = por %p37, %p38
      %p40 = scmp.ne.s32.totalorder %s26, %s27
      %p41 = scmp.eq.s32.totalorder %s19, 1
      %p42 = por %p40, %p41
      %p44 = scmp.ne.s32.totalorder %s27, %s43
      %p45 = scmp.eq.s32.totalorder %s19, 0
      %p46 = por %p44, %p45
      %s48 = sadd.s32 %s47, 1
      %p51 = scmp.eq.s32.totalorder %s13, 1
      %p52 = scmp.ne.s32.totalorder %s47, %s49
      %p53 = scmp.eq.s32.totalorder %s13, 0
      %p54 = por %p52, %p53
      %p55 = scmp.ne.s32.totalorder %s47, %s49
      %p56 = scmp.eq.s32.totalorder %s18, 1
      %p57 = por %p55, %p56
      %p58 = scmp.ne.s32.totalorder %s49, %s50
      %p59 = scmp.eq.s32.totalorder %s18, 0
      %p60 = por %p58, %p59
      %p61 = scmp.ne.s32.totalorder %s49, %s50
      %p62 = scmp.eq.s32.totalorder %s19, 1
      %p63 = por %p61, %p62
      %p65 = scmp.ne.s32.totalorder %s50, %s64
      %p66 = scmp.eq.s32.totalorder %s19, 0
      %p67 = por %p65, %p66
      %s69 = sadd.s32 %s68, 1
      %p72 = scmp.eq.s32.totalorder %s13, 1
      %p73 = scmp.ne.s32.totalorder %s68, %s70
      %p74 = scmp.eq.s32.totalorder %s13, 0
      %p75 = por %p73, %p74
      %p76 = scmp.ne.s32.totalorder %s68, %s70
      %p77 = scmp.eq.s32.totalorder %s18, 1
      %p78 = por %p76, %p77
      %p79 = scmp.ne.s32.totalorder %s70, %s71
      %p80 = scmp.eq.s32.totalorder %s18, 0
      %p81 = por %p79, %p80
      %p82 = scmp.ne.s32.totalorder %s70, %s71
      %p83 = scmp.eq.s32.totalorder %s19, 1
      %p84 = por %p82, %p83
      %p86 = scmp.ne.s32.totalorder %s71, %s85
      %p87 = scmp.eq.s32.totalorder %s19, 0
      %p88 = por %p86, %p87
      %s90 = sadd.s32 %s89, 1
      %p93 = scmp.eq.s32.totalorder %s13, 1
      %p94 = scmp.ne.s32.totalorder %s89, %s91
      %p95 = scmp.eq.s32.totalorder %s13, 0
      %p96 = por %p94, %p95
      %p97 = scmp.ne.s32.totalorder %s89, %s91
      %p98 = scmp.eq.s32.totalorder %s18, 1
      %p99 = por %p97, %p98
      %p100 = scmp.ne.s32.totalorder %s91, %s92
      %p101 = scmp.eq.s32.totalorder %s18, 0
      %p102 = por %p100, %p101
      %p103 = scmp.ne.s32.totalorder %s91, %s92
      %p104 = scmp.eq.s32.totalorder %s19, 1
      %p105 = por %p103, %p104
      %p107 = scmp.ne.s32.totalorder %s92, %s106
      %p108 = scmp.eq.s32.totalorder %s19, 0
      %p109 = por %p107, %p108
      %s111 = sadd.s32 %s110, 1
      %p114 = scmp.eq.s32.totalorder %s13, 1
      %p115 = scmp.ne.s32.totalorder %s110, %s112
      %p116 = scmp.eq.s32.totalorder %s13, 0
      %p117 = por %p115, %p116
      %p118 = scmp.ne.s32.totalorder %s110, %s112
      %p119 = scmp.eq.s32.totalorder %s18, 1
      %p120 = por %p118, %p119
      %p121 = scmp.ne.s32.totalorder %s112, %s113
      %p122 = scmp.eq.s32.totalorder %s18, 0
      %p123 = por %p121, %p122
      %p124 = scmp.ne.s32.totalorder %s112, %s113
      %p125 = scmp.eq.s32.totalorder %s19, 1
      %p126 = por %p124, %p125
      %p128 = scmp.ne.s32.totalorder %s113, %s127
      %p129 = scmp.eq.s32.totalorder %s19, 0
      %p130 = por %p128, %p129
      %s131 = ssub.s32 %s13, %s20
      %p132 = scmp.eq.s32.totalorder %s131, 0
      %s134 = sadd.s32 %s133, 1
      %s135 = scalar_select %p132, %s133, %s134
      %p138 = pneg %p132
      %p139 = scmp.eq.s32.totalorder %s13, 1
      %p140 = por %p138, %p139
      %p141 = scmp.ne.s32.totalorder %s133, %s136
      %p142 = scmp.eq.s32.totalorder %s13, 0
      %p143 = por %p141, %p142
      %p144 = scmp.ne.s32.totalorder %s133, %s136
      %p145 = scmp.eq.s32.totalorder %s18, 1
      %p146 = por %p144, %p145
      %p147 = scmp.ne.s32.totalorder %s136, %s137
      %p148 = scmp.eq.s32.totalorder %s18, 0
      %p149 = por %p147, %p148
      %p150 = scmp.ne.s32.totalorder %s136, %s137
      %p151 = scmp.eq.s32.totalorder %s19, 1
      %p152 = por %p150, %p151
      %p154 = scmp.ne.s32.totalorder %s137, %s153
      %p155 = scmp.eq.s32.totalorder %s19, 0
      %p156 = por %p154, %p155
      %p157 = scmp.le.s32.totalorder 1, %s13
      %p158 = scmp.lt.s32.totalorder %s13, 3
      %p159 = pnand %p157, %p158
      %p160 = pneg %p159
      // Predicated region
      $region9: #{tpu_custom_call.1} parent=5 // pred_check
        _
      $region10: #{tpu_custom_call.1} parent=5 // pred_check_branch
        %162 = sbr.rel (%p159) target = $region12
      $region11: #{tpu_custom_call.1} parent=5 // pred_region
        %s163 = ssub.s32 %s13, 1
        // Predicated region
        $region13: #{tpu_custom_call.1} parent=11 // pred_check
          %p164 = pneg %p60
        $region14: #{tpu_custom_call.1} parent=11 // pred_check_branch
          %166 = sbr.rel (%p164) target = $region16
        $region15: #{tpu_custom_call.1} parent=11 // pred_region
          _
        $region16: #{tpu_custom_call.1} parent=11 // pred_fallthru
          _
        // Predicated region
        $region17: #{tpu_custom_call.1} parent=11 // pred_check
          %p167 = pneg %p81
        $region18: #{tpu_custom_call.1} parent=11 // pred_check_branch
          %169 = sbr.rel (%p167) target = $region20
        $region19: #{tpu_custom_call.1} parent=11 // pred_region
          _
        $region20: #{tpu_custom_call.1} parent=11 // pred_fallthru
          _
        // Predicated region
        $region21: #{tpu_custom_call.1} parent=11 // pred_check
          %p170 = pneg %p102
        $region22: #{tpu_custom_call.1} parent=11 // pred_check_branch
          %172 = sbr.rel (%p170) target = $region24
        $region23: #{tpu_custom_call.1} parent=11 // pred_region
          %174 = vsyncadd [#allocation4], 0
          %s175 = sshll.u32 %s3, 4
          %s176 = int_to_ptr.hbm [resolvable:$true] %s175
          %s177 = sshll.u32 [#allocation3], 4
          %s178 = int_to_ptr.vmem [resolvable:$true] %s177
          %183 = dma.hbm_to_vmem [thread:$0]  %s176, 7680, %s178, [#allocation4], 128, 128, 8
        $region24: #{tpu_custom_call.1} parent=11 // pred_fallthru
          _
        // Predicated region
        $region25: #{tpu_custom_call.1} parent=11 // pred_check
          %p184 = pneg %p123
        $region26: #{tpu_custom_call.1} parent=11 // pred_check_branch
          %186 = sbr.rel (%p184) target = $region28
        $region27: #{tpu_custom_call.1} parent=11 // pred_region
          _
        $region28: #{tpu_custom_call.1} parent=11 // pred_fallthru
          _
      $region12: #{tpu_custom_call.1} parent=5 // pred_fallthru
        _
      %p187 = scmp.lt.s32.totalorder %s13, 2
      // Predicated region
      $region29: #{tpu_custom_call.1} parent=5 // pred_check
        %p188 = pneg %p187
      $region30: #{tpu_custom_call.1} parent=5 // pred_check_branch
        %190 = sbr.rel (%p188) target = $region32
      $region31: #{tpu_custom_call.1} parent=5 // pred_region
        // Predicated region
        $region33: #{tpu_custom_call.1} parent=31 // pred_check
          %p191 = pneg %p33
        $region34: #{tpu_custom_call.1} parent=31 // pred_check_branch
          %193 = sbr.rel (%p191) target = $region36
        $region35: #{tpu_custom_call.1} parent=31 // pred_region
          %s194 = smul.u32 20, %s13
          %p195 = scmp.lt.s32.totalorder %s194, 39
          %s196 = scalar_select %p195, %s194, 39
          %s197 = smul.addr %s196, 8
          %s198 = scalar_lea.vmem %s0, %s197
          %s199 = smul.u32 20, %s13
        $region36: #{tpu_custom_call.1} parent=31 // pred_fallthru
          _
      $region32: #{tpu_custom_call.1} parent=5 // pred_fallthru
        _
      %p200 = scmp.le.s32.totalorder 1, %s13
      %p201 = scmp.lt.s32.totalorder %s13, 3
      %p202 = pnand %p200, %p201
      %p203 = pneg %p202
      // Predicated region
      $region37: #{tpu_custom_call.1} parent=5 // pred_check
        _
      $region38: #{tpu_custom_call.1} parent=5 // pred_check_branch
        %205 = sbr.rel (%p202) target = $region40
      $region39: #{tpu_custom_call.1} parent=5 // pred_region
        %s206 = ssub.s32 %s13, 1
        // Predicated region
        $region41: #{tpu_custom_call.1} parent=39 // pred_check
          %p207 = pneg %p102
        $region42: #{tpu_custom_call.1} parent=39 // pred_check_branch
          %209 = sbr.rel (%p207) target = $region44
        $region43: #{tpu_custom_call.1} parent=39 // pred_region
          %211 = dma.done [#allocation4], 7680
        $region44: #{tpu_custom_call.1} parent=39 // pred_fallthru
          _
        %s212 = smul.u32 20, %s18
        %p213 = scmp.lt.s32.totalorder %s212, 39
        %s214 = scalar_select %p213, %s212, 39
        %s215 = smul.addr %s214, 8
        %s216 = scalar_lea.vmem %s0, %s215
        %p217 = pneg %p39
        %p218 = pneg %p36
        %p219 = pneg %p60
        %p220 = pneg %p57
        %p221 = pneg %p81
        %p222 = pneg %p78
        %p223 = pneg %p102
        %p224 = pneg %p99
        %p225 = pneg %p123
        %p226 = pneg %p120
        %p227 = pneg %p149
        %p228 = pneg %p146
        %s229 = smul.u32 20, %s18
        %p230 = scmp.lt.s32.totalorder %s229, 39
        %s231 = scalar_select %p230, %s229, 39
        %s232 = smul.addr %s231, 8
        %s233 = scalar_lea.vmem %s5, %s232
        %s234 = smul.u32 20, %s18
        %p235 = scmp.lt.s32.totalorder %s234, 39
        %s236 = scalar_select %p235, %s234, 39
        %s237 = smul.addr %s236, 8
        %s238 = scalar_lea.vmem %s0, %s237
        %s239 = smul.u32 20, %s18
        %s240 = smul.u32 20, %s18
        %p241 = scmp.lt.s32.totalorder %s240, 39
        %s242 = scalar_select %p241, %s240, 39
        %s243 = smul.addr %s242, 8
        %s244 = scalar_lea.vmem %s5, %s243
        %s245 = smul.u32 20, %s18
        %v247 = vld [vmem:[%s238] sm:$0xff]
        %v248 = vld [vmem:[%s238 + $0x8] sm:$0xff]
        %v249 = vld [vmem:[%s238 + $0x10] sm:$0xff]
        %v250 = vld [vmem:[%s238 + $0x18] sm:$0xff]
        %v251 = vld [vmem:[%s238 + $0x20] sm:$0xff]
        %v252 = vld [vmem:[%s238 + $0x28] sm:$0xff]
        %v253 = vld [vmem:[%s238 + $0x30] sm:$0xff]
        %v254 = vld [vmem:[%s238 + $0x38] sm:$0xff]
        %v255 = vld [vmem:[%s238 + $0x40] sm:$0xff]
        %v256 = vld [vmem:[%s238 + $0x48] sm:$0xff]
        %v257 = vld [vmem:[%s238 + $0x50] sm:$0xff]
        %v258 = vld [vmem:[%s238 + $0x58] sm:$0xff]
        %v259 = vld [vmem:[%s238 + $0x60] sm:$0xff]
        %v260 = vld [vmem:[%s238 + $0x68] sm:$0xff]
        %v261 = vld [vmem:[%s238 + $0x70] sm:$0xff]
        %v262 = vld [vmem:[%s238 + $0x78] sm:$0xff]
        %v263 = vld [vmem:[%s238 + $0x80] sm:$0xff]
        %v264 = vld [vmem:[%s238 + $0x88] sm:$0xff]
        %v265 = vld [vmem:[%s238 + $0x90] sm:$0xff]
        %v266 = vld [vmem:[%s238 + $0x98] sm:$0xff]
        %v267 = vpack.c.bf16 %v248, %v247
        %v268 = vpack.c.bf16 %v250, %v249
        %v269 = vpack.c.bf16 %v252, %v251
        %v270 = vpack.c.bf16 %v254, %v253
        %v271 = vpack.c.bf16 %v256, %v255
        %v272 = vpack.c.bf16 %v258, %v257
        %v273 = vpack.c.bf16 %v260, %v259
        %v274 = vpack.c.bf16 %v262, %v261
        %v275 = vpack.c.bf16 %v264, %v263
        %v276 = vpack.c.bf16 %v266, %v265
        %v277 = vld [vmem:[%s1] sm:$0xf]
        %v278 = vld [vmem:[%s1 + $0x4] sm:$0xf]
        %v279 = vld [vmem:[%s2] sm:$0x1]
        %v281 = vperm.slane %v279, 0
        %v285 = vunpack.c.l.b16 %v277
        %v286 = vunpack.c.l.b16 %v278
        %v287 = vpack.c.b16 %v286, %v285
        %vm289 = vcmask 130048
        %v291 = vsel %vm289, %v267, 0
        %v294 = vsel %vm289, %v268, 0
        %v297 = vsel %vm289, %v269, 0
        %v300 = vsel %vm289, %v270, 0
        %v303 = vsel %vm289, %v271, 0
        %v306 = vsel %vm289, %v272, 0
        %v309 = vsel %vm289, %v273, 0
        %v312 = vsel %vm289, %v274, 0
        %v315 = vsel %vm289, %v275, 0
        %v318 = vsel %vm289, %v276, 0
        %320 = vmatpush.bf16.msra.mxu0 0
        %321 = vmatpush.bf16.msra.mxu0 0
        %322 = vmatpush.bf16.msra.mxu0 0
        %323 = vmatpush.bf16.msra.mxu0 0
        %324 = vmatpush.bf16.msra.mxu0 0
        %325 = vmatpush.bf16.msra.mxu0 0
        %326 = vmatpush.bf16.msra.mxu0 0
        %327 = vmatpush.bf16.msra.mxu0 %v287
        %328 = vmatmul.bf16.gmra.mxu0 %v291
        %v329 = vpop.f32.mrf.mxu0
        %v330 = vadd.f32 %v281, %v329
        %v331 = vpop.f32.mrf.mxu0
        %v332 = vadd.f32 %v281, %v331
        %333 = vmatmul.bf16.gmra.mxu0 %v294
        %v334 = vpop.f32.mrf.mxu0
        %v335 = vadd.f32 %v281, %v334
        %v336 = vpop.f32.mrf.mxu0
        %v337 = vadd.f32 %v281, %v336
        %338 = vmatmul.bf16.gmra.mxu0 %v297
        %v339 = vpop.f32.mrf.mxu0
        %v340 = vadd.f32 %v281, %v339
        %v341 = vpop.f32.mrf.mxu0
        %v342 = vadd.f32 %v281, %v341
        %343 = vmatmul.bf16.gmra.mxu0 %v300
        %v344 = vpop.f32.mrf.mxu0
        %v345 = vadd.f32 %v281, %v344
        %v346 = vpop.f32.mrf.mxu0
        %v347 = vadd.f32 %v281, %v346
        %348 = vmatmul.bf16.gmra.mxu0 %v303
        %v349 = vpop.f32.mrf.mxu0
        %v350 = vadd.f32 %v281, %v349
        %v351 = vpop.f32.mrf.mxu0
        %v352 = vadd.f32 %v281, %v351
        %353 = vmatmul.bf16.gmra.mxu0 %v306
        %v354 = vpop.f32.mrf.mxu0
        %v355 = vadd.f32 %v281, %v354
        %v356 = vpop.f32.mrf.mxu0
        %v357 = vadd.f32 %v281, %v356
        %358 = vmatmul.bf16.gmra.mxu0 %v309
        %v359 = vpop.f32.mrf.mxu0
        %v360 = vadd.f32 %v281, %v359
        %v361 = vpop.f32.mrf.mxu0
        %v362 = vadd.f32 %v281, %v361
        %363 = vmatmul.bf16.gmra.mxu0 %v312
        %v364 = vpop.f32.mrf.mxu0
        %v365 = vadd.f32 %v281, %v364
        %v366 = vpop.f32.mrf.mxu0
        %v367 = vadd.f32 %v281, %v366
        %368 = vmatmul.bf16.gmra.mxu0 %v315
        %v369 = vpop.f32.mrf.mxu0
        %v370 = vadd.f32 %v281, %v369
        %v371 = vpop.f32.mrf.mxu0
        %v372 = vadd.f32 %v281, %v371
        %373 = vmatmul.bf16.gmra.mxu0 %v318
        %v374 = vpop.f32.mrf.mxu0
        %v375 = vadd.f32 %v281, %v374
        %v376 = vpop.f32.mrf.mxu0
        %v377 = vadd.f32 %v281, %v376
        %378 = vdwg.mxu0
        %v379 = vmax.f32 %v330, 0.0
        %v380 = vmax.f32 %v332, 0.0
        %v381 = vmax.f32 %v335, 0.0
        %v382 = vmax.f32 %v337, 0.0
        %v383 = vmax.f32 %v340, 0.0
        %v384 = vmax.f32 %v342, 0.0
        %v385 = vmax.f32 %v345, 0.0
        %v386 = vmax.f32 %v347, 0.0
        %v387 = vmax.f32 %v350, 0.0
        %v388 = vmax.f32 %v352, 0.0
        %v389 = vmax.f32 %v355, 0.0
        %v390 = vmax.f32 %v357, 0.0
        %v391 = vmax.f32 %v360, 0.0
        %v392 = vmax.f32 %v362, 0.0
        %v393 = vmax.f32 %v365, 0.0
        %v394 = vmax.f32 %v367, 0.0
        %v395 = vmax.f32 %v370, 0.0
        %v396 = vmax.f32 %v372, 0.0
        %v397 = vmax.f32 %v375, 0.0
        %v398 = vmax.f32 %v377, 0.0
        %v399 = vpack.c.bf16 %v380, %v379
        %v400 = vpack.c.bf16 %v382, %v381
        %v401 = vpack.c.bf16 %v384, %v383
        %v402 = vpack.c.bf16 %v386, %v385
        %v403 = vpack.c.bf16 %v388, %v387
        %v404 = vpack.c.bf16 %v390, %v389
        %v405 = vpack.c.bf16 %v392, %v391
        %v406 = vpack.c.bf16 %v394, %v393
        %v407 = vpack.c.bf16 %v396, %v395
        %v408 = vpack.c.bf16 %v398, %v397
        %v409 = vld [vmem:[#allocation3] sm:$0xff]
        %v410 = vld [vmem:[#allocation3 + $0x8] sm:$0xff]
        %v411 = vld [vmem:[#allocation3 + $0x10] sm:$0xff]
        %v412 = vld [vmem:[#allocation3 + $0x18] sm:$0xff]
        %v413 = vld [vmem:[#allocation3 + $0x20] sm:$0xff]
        %v414 = vld [vmem:[#allocation3 + $0x28] sm:$0xff]
        %v415 = vld [vmem:[#allocation3 + $0x30] sm:$0xff]
        %v416 = vld [vmem:[#allocation3 + $0x38] sm:$0xff]
        %v417 = vld [vmem:[#allocation3 + $0x40] sm:$0xff]
        %v418 = vld [vmem:[#allocation3 + $0x48] sm:$0xff]
        %v419 = vld [vmem:[#allocation3 + $0x50] sm:$0xff]
        %v420 = vld [vmem:[#allocation3 + $0x58] sm:$0xff]
        %v421 = vld [vmem:[#allocation3 + $0x60] sm:$0xff]
        %v422 = vld [vmem:[#allocation3 + $0x68] sm:$0xff]
        %v423 = vld [vmem:[#allocation3 + $0x70] sm:$0xff]
        %v424 = vld [vmem:[#allocation3 + $0x78] sm:$0xff]
        %v425 = vld [vmem:[#allocation3 + $0x80] sm:$0xff]
        %v426 = vld [vmem:[#allocation3 + $0x88] sm:$0xff]
        %v427 = vld [vmem:[#allocation3 + $0x90] sm:$0xff]
        %v428 = vld [vmem:[#allocation3 + $0x98] sm:$0xff]
        %s429 = scalar_lea.vmem [#allocation3], 160
        %v430 = vld [vmem:[%s429] sm:$0xff]
        %v431 = vld [vmem:[%s429 + $0x8] sm:$0xff]
        %v432 = vld [vmem:[%s429 + $0x10] sm:$0xff]
        %v433 = vld [vmem:[%s429 + $0x18] sm:$0xff]
        %v434 = vld [vmem:[%s429 + $0x20] sm:$0xff]
        %v435 = vld [vmem:[%s429 + $0x28] sm:$0xff]
        %v436 = vld [vmem:[%s429 + $0x30] sm:$0xff]
        %v437 = vld [vmem:[%s429 + $0x38] sm:$0xff]
        %v438 = vld [vmem:[%s429 + $0x40] sm:$0xff]
        %v439 = vld [vmem:[%s429 + $0x48] sm:$0xff]
        %v440 = vld [vmem:[%s429 + $0x50] sm:$0xff]
        %v441 = vld [vmem:[%s429 + $0x58] sm:$0xff]
        %v442 = vld [vmem:[%s429 + $0x60] sm:$0xff]
        %v443 = vld [vmem:[%s429 + $0x68] sm:$0xff]
        %v444 = vld [vmem:[%s429 + $0x70] sm:$0xff]
        %v445 = vld [vmem:[%s429 + $0x78] sm:$0xff]
        %v446 = vld [vmem:[%s429 + $0x80] sm:$0xff]
        %v447 = vld [vmem:[%s429 + $0x88] sm:$0xff]
        %v448 = vld [vmem:[%s429 + $0x90] sm:$0xff]
        %v449 = vld [vmem:[%s429 + $0x98] sm:$0xff]
        %v470 = vunpack.c.l.b16 %v430
        %v471 = vunpack.c.h.b16 %v430
        %v472 = vunpack.c.l.b16 %v431
        %v473 = vunpack.c.h.b16 %v431
        %v474 = vunpack.c.l.b16 %v432
        %v475 = vunpack.c.h.b16 %v432
        %v476 = vunpack.c.l.b16 %v433
        %v477 = vunpack.c.h.b16 %v433
        %v478 = vunpack.c.l.b16 %v434
        %v479 = vunpack.c.h.b16 %v434
        %v480 = vunpack.c.l.b16 %v435
        %v481 = vunpack.c.h.b16 %v435
        %v482 = vunpack.c.l.b16 %v436
        %v483 = vunpack.c.h.b16 %v436
        %v484 = vunpack.c.l.b16 %v437
        %v485 = vunpack.c.h.b16 %v437
        %v486 = vunpack.c.l.b16 %v438
        %v487 = vunpack.c.h.b16 %v438
        %v488 = vunpack.c.l.b16 %v439
        %v489 = vunpack.c.h.b16 %v439
        %v490 = vunpack.c.l.b16 %v440
        %v491 = vunpack.c.h.b16 %v440
        %v492 = vunpack.c.l.b16 %v441
        %v493 = vunpack.c.h.b16 %v441
        %v494 = vunpack.c.l.b16 %v442
        %v495 = vunpack.c.h.b16 %v442
        %v496 = vunpack.c.l.b16 %v443
        %v497 = vunpack.c.h.b16 %v443
        %v498 = vunpack.c.l.b16 %v444
        %v499 = vunpack.c.h.b16 %v444
        %v500 = vunpack.c.l.b16 %v445
        %v501 = vunpack.c.h.b16 %v445
        %v502 = vunpack.c.l.b16 %v446
        %v503 = vunpack.c.h.b16 %v446
        %v504 = vunpack.c.l.b16 %v447
        %v505 = vunpack.c.h.b16 %v447
        %v506 = vunpack.c.l.b16 %v448
        %v507 = vunpack.c.h.b16 %v448
        %v508 = vunpack.c.l.b16 %v449
        %v509 = vunpack.c.h.b16 %v449
        %v510 = vpack.c.b16 %v472, %v470
        %v511 = vpack.c.b16 %v473, %v471
        %v512 = vpack.c.b16 %v476, %v474
        %v513 = vpack.c.b16 %v477, %v475
        %v514 = vpack.c.b16 %v480, %v478
        %v515 = vpack.c.b16 %v481, %v479
        %v516 = vpack.c.b16 %v484, %v482
        %v517 = vpack.c.b16 %v485, %v483
        %v518 = vpack.c.b16 %v488, %v486
        %v519 = vpack.c.b16 %v489, %v487
        %v520 = vpack.c.b16 %v492, %v490
        %v521 = vpack.c.b16 %v493, %v491
        %v522 = vpack.c.b16 %v496, %v494
        %v523 = vpack.c.b16 %v497, %v495
        %v524 = vpack.c.b16 %v500, %v498
        %v525 = vpack.c.b16 %v501, %v499
        %v526 = vpack.c.b16 %v504, %v502
        %v527 = vpack.c.b16 %v505, %v503
        %v528 = vpack.c.b16 %v508, %v506
        %v529 = vpack.c.b16 %v509, %v507
        %550 = vrot.lane.b32.xlu0 %v399, 96
        %v551 = vpop.permute.xlu0 %550
        %552 = vrot.lane.b32.xlu0 %v400, 96
        %v553 = vpop.permute.xlu0 %552
        %554 = vrot.lane.b32.xlu0 %v401, 96
        %v555 = vpop.permute.xlu0 %554
        %556 = vrot.lane.b32.xlu0 %v402, 96
        %v557 = vpop.permute.xlu0 %556
        %558 = vrot.lane.b32.xlu0 %v403, 96
        %v559 = vpop.permute.xlu0 %558
        %560 = vrot.lane.b32.xlu0 %v404, 96
        %v561 = vpop.permute.xlu0 %560
        %562 = vrot.lane.b32.xlu0 %v405, 96
        %v563 = vpop.permute.xlu0 %562
        %564 = vrot.lane.b32.xlu0 %v406, 96
        %v565 = vpop.permute.xlu0 %564
        %566 = vrot.lane.b32.xlu0 %v407, 96
        %v567 = vpop.permute.xlu0 %566
        %568 = vrot.lane.b32.xlu0 %v408, 96
        %v569 = vpop.permute.xlu0 %568
        %vm580 = vcmask 261120
        %v582 = vsel %vm580, %v511, 0
        %v585 = vsel %vm580, %v513, 0
        %v588 = vsel %vm580, %v515, 0
        %v591 = vsel %vm580, %v517, 0
        %v594 = vsel %vm580, %v519, 0
        %v597 = vsel %vm580, %v521, 0
        %v600 = vsel %vm580, %v523, 0
        %v603 = vsel %vm580, %v525, 0
        %v606 = vsel %vm580, %v527, 0
        %v609 = vsel %vm580, %v529, 0
        %611 = vmatpush.bf16.msra.mxu0 %v565
        %612 = vmatpush.bf16.msra.mxu0 %v563
        %613 = vmatpush.bf16.msra.mxu0 %v561
        %614 = vmatpush.bf16.msra.mxu0 %v559
        %615 = vmatpush.bf16.msra.mxu0 %v557
        %616 = vmatpush.bf16.msra.mxu0 %v555
        %617 = vmatpush.bf16.msra.mxu0 %v553
        %618 = vmatpush.bf16.msra.mxu0 %v551
        %619 = vmatmul.bf16.gmra.mxu0 %v510
        %v620 = vpop.f32.mrf.mxu0
        %v621 = vadd.f32 0.0, %v620
        %v622 = vpop.f32.mrf.mxu0
        %v623 = vadd.f32 0.0, %v622
        %624 = vmatmul.bf16.gmra.mxu0 %v512
        %v625 = vpop.f32.mrf.mxu0
        %v626 = vadd.f32 0.0, %v625
        %v627 = vpop.f32.mrf.mxu0
        %v628 = vadd.f32 0.0, %v627
        %629 = vmatmul.bf16.gmra.mxu0 %v514
        %v630 = vpop.f32.mrf.mxu0
        %v631 = vadd.f32 0.0, %v630
        %v632 = vpop.f32.mrf.mxu0
        %v633 = vadd.f32 0.0, %v632
        %634 = vmatmul.bf16.gmra.mxu0 %v516
        %v635 = vpop.f32.mrf.mxu0
        %v636 = vadd.f32 0.0, %v635
        %v637 = vpop.f32.mrf.mxu0
        %v638 = vadd.f32 0.0, %v637
        %639 = vmatmul.bf16.gmra.mxu0 %v518
        %v640 = vpop.f32.mrf.mxu0
        %v641 = vadd.f32 0.0, %v640
        %v642 = vpop.f32.mrf.mxu0
        %v643 = vadd.f32 0.0, %v642
        %644 = vmatmul.bf16.gmra.mxu0 %v520
        %v645 = vpop.f32.mrf.mxu0
        %v646 = vadd.f32 0.0, %v645
        %v647 = vpop.f32.mrf.mxu0
        %v648 = vadd.f32 0.0, %v647
        %649 = vmatmul.bf16.gmra.mxu0 %v522
        %v650 = vpop.f32.mrf.mxu0
        %v651 = vadd.f32 0.0, %v650
        %v652 = vpop.f32.mrf.mxu0
        %v653 = vadd.f32 0.0, %v652
        %654 = vmatmul.bf16.gmra.mxu0 %v524
        %v655 = vpop.f32.mrf.mxu0
        %v656 = vadd.f32 0.0, %v655
        %v657 = vpop.f32.mrf.mxu0
        %v658 = vadd.f32 0.0, %v657
        %659 = vmatmul.bf16.gmra.mxu0 %v526
        %v660 = vpop.f32.mrf.mxu0
        %v661 = vadd.f32 0.0, %v660
        %v662 = vpop.f32.mrf.mxu0
        %v663 = vadd.f32 0.0, %v662
        %664 = vmatmul.bf16.gmra.mxu0 %v528
        %v665 = vpop.f32.mrf.mxu0
        %v666 = vadd.f32 0.0, %v665
        %v667 = vpop.f32.mrf.mxu0
        %v668 = vadd.f32 0.0, %v667
        %669 = vdwg.mxu0
        %670 = vmatpush.bf16.msra.mxu0 0
        %671 = vmatpush.bf16.msra.mxu0 0
        %672 = vmatpush.bf16.msra.mxu0 0
        %673 = vmatpush.bf16.msra.mxu0 0
        %674 = vmatpush.bf16.msra.mxu0 0
        %675 = vmatpush.bf16.msra.mxu0 0
        %676 = vmatpush.bf16.msra.mxu0 %v569
        %677 = vmatpush.bf16.msra.mxu0 %v567
        %678 = vmatmul.bf16.gmra.mxu0 %v582
        %v679 = vpop.f32.mrf.mxu0
        %v680 = vadd.f32 %v621, %v679
        %v681 = vpop.f32.mrf.mxu0
        %v682 = vadd.f32 %v623, %v681
        %683 = vmatmul.bf16.gmra.mxu0 %v585
        %v684 = vpop.f32.mrf.mxu0
        %v685 = vadd.f32 %v626, %v684
        %v686 = vpop.f32.mrf.mxu0
        %v687 = vadd.f32 %v628, %v686
        %688 = vmatmul.bf16.gmra.mxu0 %v588
        %v689 = vpop.f32.mrf.mxu0
        %v690 = vadd.f32 %v631, %v689
        %v691 = vpop.f32.mrf.mxu0
        %v692 = vadd.f32 %v633, %v691
        %693 = vmatmul.bf16.gmra.mxu0 %v591
        %v694 = vpop.f32.mrf.mxu0
        %v695 = vadd.f32 %v636, %v694
        %v696 = vpop.f32.mrf.mxu0
        %v697 = vadd.f32 %v638, %v696
        %698 = vmatmul.bf16.gmra.mxu0 %v594
        %v699 = vpop.f32.mrf.mxu0
        %v700 = vadd.f32 %v641, %v699
        %v701 = vpop.f32.mrf.mxu0
        %v702 = vadd.f32 %v643, %v701
        %703 = vmatmul.bf16.gmra.mxu0 %v597
        %v704 = vpop.f32.mrf.mxu0
        %v705 = vadd.f32 %v646, %v704
        %v706 = vpop.f32.mrf.mxu0
        %v707 = vadd.f32 %v648, %v706
        %708 = vmatmul.bf16.gmra.mxu0 %v600
        %v709 = vpop.f32.mrf.mxu0
        %v710 = vadd.f32 %v651, %v709
        %v711 = vpop.f32.mrf.mxu0
        %v712 = vadd.f32 %v653, %v711
        %713 = vmatmul.bf16.gmra.mxu0 %v603
        %v714 = vpop.f32.mrf.mxu0
        %v715 = vadd.f32 %v656, %v714
        %v716 = vpop.f32.mrf.mxu0
        %v717 = vadd.f32 %v658, %v716
        %718 = vmatmul.bf16.gmra.mxu0 %v606
        %v719 = vpop.f32.mrf.mxu0
        %v720 = vadd.f32 %v661, %v719
        %v721 = vpop.f32.mrf.mxu0
        %v722 = vadd.f32 %v663, %v721
        %723 = vmatmul.bf16.gmra.mxu0 %v609
        %v724 = vpop.f32.mrf.mxu0
        %v725 = vadd.f32 %v666, %v724
        %v726 = vpop.f32.mrf.mxu0
        %v727 = vadd.f32 %v668, %v726
        %728 = vdwg.mxu0
        %v749 = vunpack.c.l.b16 %v409
        %v750 = vunpack.c.h.b16 %v409
        %v751 = vunpack.c.l.b16 %v410
        %v752 = vunpack.c.h.b16 %v410
        %v753 = vunpack.c.l.b16 %v411
        %v754 = vunpack.c.h.b16 %v411
        %v755 = vunpack.c.l.b16 %v412
        %v756 = vunpack.c.h.b16 %v412
        %v757 = vunpack.c.l.b16 %v413
        %v758 = vunpack.c.h.b16 %v413
        %v759 = vunpack.c.l.b16 %v414
        %v760 = vunpack.c.h.b16 %v414
        %v761 = vunpack.c.l.b16 %v415
        %v762 = vunpack.c.h.b16 %v415
        %v763 = vunpack.c.l.b16 %v416
        %v764 = vunpack.c.h.b16 %v416
        %v765 = vunpack.c.l.b16 %v417
        %v766 = vunpack.c.h.b16 %v417
        %v767 = vunpack.c.l.b16 %v418
        %v768 = vunpack.c.h.b16 %v418
        %v769 = vunpack.c.l.b16 %v419
        %v770 = vunpack.c.h.b16 %v419
        %v771 = vunpack.c.l.b16 %v420
        %v772 = vunpack.c.h.b16 %v420
        %v773 = vunpack.c.l.b16 %v421
        %v774 = vunpack.c.h.b16 %v421
        %v775 = vunpack.c.l.b16 %v422
        %v776 = vunpack.c.h.b16 %v422
        %v777 = vunpack.c.l.b16 %v423
        %v778 = vunpack.c.h.b16 %v423
        %v779 = vunpack.c.l.b16 %v424
        %v780 = vunpack.c.h.b16 %v424
        %v781 = vunpack.c.l.b16 %v425
        %v782 = vunpack.c.h.b16 %v425
        %v783 = vunpack.c.l.b16 %v426
        %v784 = vunpack.c.h.b16 %v426
        %v785 = vunpack.c.l.b16 %v427
        %v786 = vunpack.c.h.b16 %v427
        %v787 = vunpack.c.l.b16 %v428
        %v788 = vunpack.c.h.b16 %v428
        %v789 = vpack.c.b16 %v751, %v749
        %v790 = vpack.c.b16 %v752, %v750
        %v791 = vpack.c.b16 %v755, %v753
        %v792 = vpack.c.b16 %v756, %v754
        %v793 = vpack.c.b16 %v759, %v757
        %v794 = vpack.c.b16 %v760, %v758
        %v795 = vpack.c.b16 %v763, %v761
        %v796 = vpack.c.b16 %v764, %v762
        %v797 = vpack.c.b16 %v767, %v765
        %v798 = vpack.c.b16 %v768, %v766
        %v799 = vpack.c.b16 %v771, %v769
        %v800 = vpack.c.b16 %v772, %v770
        %v801 = vpack.c.b16 %v775, %v773
        %v802 = vpack.c.b16 %v776, %v774
        %v803 = vpack.c.b16 %v779, %v777
        %v804 = vpack.c.b16 %v780, %v778
        %v805 = vpack.c.b16 %v783, %v781
        %v806 = vpack.c.b16 %v784, %v782
        %v807 = vpack.c.b16 %v787, %v785
        %v808 = vpack.c.b16 %v788, %v786
        %v820 = vsel %vm580, %v790, 0
        %v823 = vsel %vm580, %v792, 0
        %v826 = vsel %vm580, %v794, 0
        %v829 = vsel %vm580, %v796, 0
        %v832 = vsel %vm580, %v798, 0
        %v835 = vsel %vm580, %v800, 0
        %v838 = vsel %vm580, %v802, 0
        %v841 = vsel %vm580, %v804, 0
        %v844 = vsel %vm580, %v806, 0
        %v847 = vsel %vm580, %v808, 0
        %849 = vmatpush.bf16.msra.mxu0 %v406
        %850 = vmatpush.bf16.msra.mxu0 %v405
        %851 = vmatpush.bf16.msra.mxu0 %v404
        %852 = vmatpush.bf16.msra.mxu0 %v403
        %853 = vmatpush.bf16.msra.mxu0 %v402
        %854 = vmatpush.bf16.msra.mxu0 %v401
        %855 = vmatpush.bf16.msra.mxu0 %v400
        %856 = vmatpush.bf16.msra.mxu0 %v399
        %857 = vmatmul.bf16.gmra.mxu0 %v789
        %v858 = vpop.f32.mrf.mxu0
        %v859 = vadd.f32 %v680, %v858
        %v860 = vpop.f32.mrf.mxu0
        %v861 = vadd.f32 %v682, %v860
        %862 = vmatmul.bf16.gmra.mxu0 %v791
        %v863 = vpop.f32.mrf.mxu0
        %v864 = vadd.f32 %v685, %v863
        %v865 = vpop.f32.mrf.mxu0
        %v866 = vadd.f32 %v687, %v865
        %867 = vmatmul.bf16.gmra.mxu0 %v793
        %v868 = vpop.f32.mrf.mxu0
        %v869 = vadd.f32 %v690, %v868
        %v870 = vpop.f32.mrf.mxu0
        %v871 = vadd.f32 %v692, %v870
        %872 = vmatmul.bf16.gmra.mxu0 %v795
        %v873 = vpop.f32.mrf.mxu0
        %v874 = vadd.f32 %v695, %v873
        %v875 = vpop.f32.mrf.mxu0
        %v876 = vadd.f32 %v697, %v875
        %877 = vmatmul.bf16.gmra.mxu0 %v797
        %v878 = vpop.f32.mrf.mxu0
        %v879 = vadd.f32 %v700, %v878
        %v880 = vpop.f32.mrf.mxu0
        %v881 = vadd.f32 %v702, %v880
        %882 = vmatmul.bf16.gmra.mxu0 %v799
        %v883 = vpop.f32.mrf.mxu0
        %v884 = vadd.f32 %v705, %v883
        %v885 = vpop.f32.mrf.mxu0
        %v886 = vadd.f32 %v707, %v885
        %887 = vmatmul.bf16.gmra.mxu0 %v801
        %v888 = vpop.f32.mrf.mxu0
        %v889 = vadd.f32 %v710, %v888
        %v890 = vpop.f32.mrf.mxu0
        %v891 = vadd.f32 %v712, %v890
        %892 = vmatmul.bf16.gmra.mxu0 %v803
        %v893 = vpop.f32.mrf.mxu0
        %v894 = vadd.f32 %v715, %v893
        %v895 = vpop.f32.mrf.mxu0
        %v896 = vadd.f32 %v717, %v895
        %897 = vmatmul.bf16.gmra.mxu0 %v805
        %v898 = vpop.f32.mrf.mxu0
        %v899 = vadd.f32 %v720, %v898
        %v900 = vpop.f32.mrf.mxu0
        %v901 = vadd.f32 %v722, %v900
        %902 = vmatmul.bf16.gmra.mxu0 %v807
        %v903 = vpop.f32.mrf.mxu0
        %v904 = vadd.f32 %v725, %v903
        %v905 = vpop.f32.mrf.mxu0
        %v906 = vadd.f32 %v727, %v905
        %907 = vdwg.mxu0
        %908 = vmatpush.bf16.msra.mxu0 0
        %909 = vmatpush.bf16.msra.mxu0 0
        %910 = vmatpush.bf16.msra.mxu0 0
        %911 = vmatpush.bf16.msra.mxu0 0
        %912 = vmatpush.bf16.msra.mxu0 0
        %913 = vmatpush.bf16.msra.mxu0 0
        %914 = vmatpush.bf16.msra.mxu0 %v408
        %915 = vmatpush.bf16.msra.mxu0 %v407
        %916 = vmatmul.bf16.gmra.mxu0 %v820
        %v917 = vpop.f32.mrf.mxu0
        %v918 = vadd.f32 %v859, %v917
        %v919 = vpop.f32.mrf.mxu0
        %v920 = vadd.f32 %v861, %v919
        %921 = vmatmul.bf16.gmra.mxu0 %v823
        %v922 = vpop.f32.mrf.mxu0
        %v923 = vadd.f32 %v864, %v922
        %v924 = vpop.f32.mrf.mxu0
        %v925 = vadd.f32 %v866, %v924
        %926 = vmatmul.bf16.gmra.mxu0 %v826
        %v927 = vpop.f32.mrf.mxu0
        %v928 = vadd.f32 %v869, %v927
        %v929 = vpop.f32.mrf.mxu0
        %v930 = vadd.f32 %v871, %v929
        %931 = vmatmul.bf16.gmra.mxu0 %v829
        %v932 = vpop.f32.mrf.mxu0
        %v933 = vadd.f32 %v874, %v932
        %v934 = vpop.f32.mrf.mxu0
        %v935 = vadd.f32 %v876, %v934
        %936 = vmatmul.bf16.gmra.mxu0 %v832
        %v937 = vpop.f32.mrf.mxu0
        %v938 = vadd.f32 %v879, %v937
        %v939 = vpop.f32.mrf.mxu0
        %v940 = vadd.f32 %v881, %v939
        %941 = vmatmul.bf16.gmra.mxu0 %v835
        %v942 = vpop.f32.mrf.mxu0
        %v943 = vadd.f32 %v884, %v942
        %v944 = vpop.f32.mrf.mxu0
        %v945 = vadd.f32 %v886, %v944
        %946 = vmatmul.bf16.gmra.mxu0 %v838
        %v947 = vpop.f32.mrf.mxu0
        %v948 = vadd.f32 %v889, %v947
        %v949 = vpop.f32.mrf.mxu0
        %v950 = vadd.f32 %v891, %v949
        %951 = vmatmul.bf16.gmra.mxu0 %v841
        %v952 = vpop.f32.mrf.mxu0
        %v953 = vadd.f32 %v894, %v952
        %v954 = vpop.f32.mrf.mxu0
        %v955 = vadd.f32 %v896, %v954
        %956 = vmatmul.bf16.gmra.mxu0 %v844
        %v957 = vpop.f32.mrf.mxu0
        %v958 = vadd.f32 %v899, %v957
        %v959 = vpop.f32.mrf.mxu0
        %v960 = vadd.f32 %v901, %v959
        %961 = vmatmul.bf16.gmra.mxu0 %v847
        %v962 = vpop.f32.mrf.mxu0
        %v963 = vadd.f32 %v904, %v962
        %v964 = vpop.f32.mrf.mxu0
        %v965 = vadd.f32 %v906, %v964
        %966 = vdwg.mxu0
        %s967 = scalar_lea.vmem [#allocation3], 320
        %v968 = vld [vmem:[%s967] sm:$0xff]
        %v969 = vld [vmem:[%s967 + $0x8] sm:$0xff]
        %v970 = vld [vmem:[%s967 + $0x10] sm:$0xff]
        %v971 = vld [vmem:[%s967 + $0x18] sm:$0xff]
        %v972 = vld [vmem:[%s967 + $0x20] sm:$0xff]
        %v973 = vld [vmem:[%s967 + $0x28] sm:$0xff]
        %v974 = vld [vmem:[%s967 + $0x30] sm:$0xff]
        %v975 = vld [vmem:[%s967 + $0x38] sm:$0xff]
        %v976 = vld [vmem:[%s967 + $0x40] sm:$0xff]
        %v977 = vld [vmem:[%s967 + $0x48] sm:$0xff]
        %v978 = vld [vmem:[%s967 + $0x50] sm:$0xff]
        %v979 = vld [vmem:[%s967 + $0x58] sm:$0xff]
        %v980 = vld [vmem:[%s967 + $0x60] sm:$0xff]
        %v981 = vld [vmem:[%s967 + $0x68] sm:$0xff]
        %v982 = vld [vmem:[%s967 + $0x70] sm:$0xff]
        %v983 = vld [vmem:[%s967 + $0x78] sm:$0xff]
        %v984 = vld [vmem:[%s967 + $0x80] sm:$0xff]
        %v985 = vld [vmem:[%s967 + $0x88] sm:$0xff]
        %v986 = vld [vmem:[%s967 + $0x90] sm:$0xff]
        %v987 = vld [vmem:[%s967 + $0x98] sm:$0xff]
        %v1008 = vunpack.c.l.b16 %v968
        %v1009 = vunpack.c.h.b16 %v968
        %v1010 = vunpack.c.l.b16 %v969
        %v1011 = vunpack.c.h.b16 %v969
        %v1012 = vunpack.c.l.b16 %v970
        %v1013 = vunpack.c.h.b16 %v970
        %v1014 = vunpack.c.l.b16 %v971
        %v1015 = vunpack.c.h.b16 %v971
        %v1016 = vunpack.c.l.b16 %v972
        %v1017 = vunpack.c.h.b16 %v972
        %v1018 = vunpack.c.l.b16 %v973
        %v1019 = vunpack.c.h.b16 %v973
        %v1020 = vunpack.c.l.b16 %v974
        %v1021 = vunpack.c.h.b16 %v974
        %v1022 = vunpack.c.l.b16 %v975
        %v1023 = vunpack.c.h.b16 %v975
        %v1024 = vunpack.c.l.b16 %v976
        %v1025 = vunpack.c.h.b16 %v976
        %v1026 = vunpack.c.l.b16 %v977
        %v1027 = vunpack.c.h.b16 %v977
        %v1028 = vunpack.c.l.b16 %v978
        %v1029 = vunpack.c.h.b16 %v978
        %v1030 = vunpack.c.l.b16 %v979
        %v1031 = vunpack.c.h.b16 %v979
        %v1032 = vunpack.c.l.b16 %v980
        %v1033 = vunpack.c.h.b16 %v980
        %v1034 = vunpack.c.l.b16 %v981
        %v1035 = vunpack.c.h.b16 %v981
        %v1036 = vunpack.c.l.b16 %v982
        %v1037 = vunpack.c.h.b16 %v982
        %v1038 = vunpack.c.l.b16 %v983
        %v1039 = vunpack.c.h.b16 %v983
        %v1040 = vunpack.c.l.b16 %v984
        %v1041 = vunpack.c.h.b16 %v984
        %v1042 = vunpack.c.l.b16 %v985
        %v1043 = vunpack.c.h.b16 %v985
        %v1044 = vunpack.c.l.b16 %v986
        %v1045 = vunpack.c.h.b16 %v986
        %v1046 = vunpack.c.l.b16 %v987
        %v1047 = vunpack.c.h.b16 %v987
        %v1048 = vpack.c.b16 %v1010, %v1008
        %v1049 = vpack.c.b16 %v1011, %v1009
        %v1050 = vpack.c.b16 %v1014, %v1012
        %v1051 = vpack.c.b16 %v1015, %v1013
        %v1052 = vpack.c.b16 %v1018, %v1016
        %v1053 = vpack.c.b16 %v1019, %v1017
        %v1054 = vpack.c.b16 %v1022, %v1020
        %v1055 = vpack.c.b16 %v1023, %v1021
        %v1056 = vpack.c.b16 %v1026, %v1024
        %v1057 = vpack.c.b16 %v1027, %v1025
        %v1058 = vpack.c.b16 %v1030, %v1028
        %v1059 = vpack.c.b16 %v1031, %v1029
        %v1060 = vpack.c.b16 %v1034, %v1032
        %v1061 = vpack.c.b16 %v1035, %v1033
        %v1062 = vpack.c.b16 %v1038, %v1036
        %v1063 = vpack.c.b16 %v1039, %v1037
        %v1064 = vpack.c.b16 %v1042, %v1040
        %v1065 = vpack.c.b16 %v1043, %v1041
        %v1066 = vpack.c.b16 %v1046, %v1044
        %v1067 = vpack.c.b16 %v1047, %v1045
        %1078 = vrot.lane.b32.xlu0 %v399, 64
        %v1079 = vpop.permute.xlu0 %1078
        %1080 = vrot.lane.b32.xlu0 %v400, 64
        %v1081 = vpop.permute.xlu0 %1080
        %1082 = vrot.lane.b32.xlu0 %v401, 64
        %v1083 = vpop.permute.xlu0 %1082
        %1084 = vrot.lane.b32.xlu0 %v402, 64
        %v1085 = vpop.permute.xlu0 %1084
        %1086 = vrot.lane.b32.xlu0 %v403, 64
        %v1087 = vpop.permute.xlu0 %1086
        %1088 = vrot.lane.b32.xlu0 %v404, 64
        %v1089 = vpop.permute.xlu0 %1088
        %1090 = vrot.lane.b32.xlu0 %v405, 64
        %v1091 = vpop.permute.xlu0 %1090
        %1092 = vrot.lane.b32.xlu0 %v406, 64
        %v1093 = vpop.permute.xlu0 %1092
        %1094 = vrot.lane.b32.xlu0 %v407, 64
        %v1095 = vpop.permute.xlu0 %1094
        %1096 = vrot.lane.b32.xlu0 %v408, 64
        %v1097 = vpop.permute.xlu0 %1096
        %v1109 = vsel %vm580, %v1049, 0
        %v1112 = vsel %vm580, %v1051, 0
        %v1115 = vsel %vm580, %v1053, 0
        %v1118 = vsel %vm580, %v1055, 0
        %v1121 = vsel %vm580, %v1057, 0
        %v1124 = vsel %vm580, %v1059, 0
        %v1127 = vsel %vm580, %v1061, 0
        %v1130 = vsel %vm580, %v1063, 0
        %v1133 = vsel %vm580, %v1065, 0
        %v1136 = vsel %vm580, %v1067, 0
        %1138 = vmatpush.bf16.msra.mxu0 %v1093
        %1139 = vmatpush.bf16.msra.mxu0 %v1091
        %1140 = vmatpush.bf16.msra.mxu0 %v1089
        %1141 = vmatpush.bf16.msra.mxu0 %v1087
        %1142 = vmatpush.bf16.msra.mxu0 %v1085
        %1143 = vmatpush.bf16.msra.mxu0 %v1083
        %1144 = vmatpush.bf16.msra.mxu0 %v1081
        %1145 = vmatpush.bf16.msra.mxu0 %v1079
        %1146 = vmatmul.bf16.gmra.mxu0 %v1048
        %v1147 = vpop.f32.mrf.mxu0
        %v1148 = vadd.f32 0.0, %v1147
        %v1149 = vpop.f32.mrf.mxu0
        %v1150 = vadd.f32 0.0, %v1149
        %1151 = vmatmul.bf16.gmra.mxu0 %v1050
        %v1152 = vpop.f32.mrf.mxu0
        %v1153 = vadd.f32 0.0, %v1152
        %v1154 = vpop.f32.mrf.mxu0
        %v1155 = vadd.f32 0.0, %v1154
        %1156 = vmatmul.bf16.gmra.mxu0 %v1052
        %v1157 = vpop.f32.mrf.mxu0
        %v1158 = vadd.f32 0.0, %v1157
        %v1159 = vpop.f32.mrf.mxu0
        %v1160 = vadd.f32 0.0, %v1159
        %1161 = vmatmul.bf16.gmra.mxu0 %v1054
        %v1162 = vpop.f32.mrf.mxu0
        %v1163 = vadd.f32 0.0, %v1162
        %v1164 = vpop.f32.mrf.mxu0
        %v1165 = vadd.f32 0.0, %v1164
        %1166 = vmatmul.bf16.gmra.mxu0 %v1056
        %v1167 = vpop.f32.mrf.mxu0
        %v1168 = vadd.f32 0.0, %v1167
        %v1169 = vpop.f32.mrf.mxu0
        %v1170 = vadd.f32 0.0, %v1169
        %1171 = vmatmul.bf16.gmra.mxu0 %v1058
        %v1172 = vpop.f32.mrf.mxu0
        %v1173 = vadd.f32 0.0, %v1172
        %v1174 = vpop.f32.mrf.mxu0
        %v1175 = vadd.f32 0.0, %v1174
        %1176 = vmatmul.bf16.gmra.mxu0 %v1060
        %v1177 = vpop.f32.mrf.mxu0
        %v1178 = vadd.f32 0.0, %v1177
        %v1179 = vpop.f32.mrf.mxu0
        %v1180 = vadd.f32 0.0, %v1179
        %1181 = vmatmul.bf16.gmra.mxu0 %v1062
        %v1182 = vpop.f32.mrf.mxu0
        %v1183 = vadd.f32 0.0, %v1182
        %v1184 = vpop.f32.mrf.mxu0
        %v1185 = vadd.f32 0.0, %v1184
        %1186 = vmatmul.bf16.gmra.mxu0 %v1064
        %v1187 = vpop.f32.mrf.mxu0
        %v1188 = vadd.f32 0.0, %v1187
        %v1189 = vpop.f32.mrf.mxu0
        %v1190 = vadd.f32 0.0, %v1189
        %1191 = vmatmul.bf16.gmra.mxu0 %v1066
        %v1192 = vpop.f32.mrf.mxu0
        %v1193 = vadd.f32 0.0, %v1192
        %v1194 = vpop.f32.mrf.mxu0
        %v1195 = vadd.f32 0.0, %v1194
        %1196 = vdwg.mxu0
        %1197 = vmatpush.bf16.msra.mxu0 0
        %1198 = vmatpush.bf16.msra.mxu0 0
        %1199 = vmatpush.bf16.msra.mxu0 0
        %1200 = vmatpush.bf16.msra.mxu0 0
        %1201 = vmatpush.bf16.msra.mxu0 0
        %1202 = vmatpush.bf16.msra.mxu0 0
        %1203 = vmatpush.bf16.msra.mxu0 %v1097
        %1204 = vmatpush.bf16.msra.mxu0 %v1095
        %1205 = vmatmul.bf16.gmra.mxu0 %v1109
        %v1206 = vpop.f32.mrf.mxu0
        %v1207 = vadd.f32 %v1148, %v1206
        %v1208 = vpop.f32.mrf.mxu0
        %v1209 = vadd.f32 %v1150, %v1208
        %1210 = vmatmul.bf16.gmra.mxu0 %v1112
        %v1211 = vpop.f32.mrf.mxu0
        %v1212 = vadd.f32 %v1153, %v1211
        %v1213 = vpop.f32.mrf.mxu0
        %v1214 = vadd.f32 %v1155, %v1213
        %1215 = vmatmul.bf16.gmra.mxu0 %v1115
        %v1216 = vpop.f32.mrf.mxu0
        %v1217 = vadd.f32 %v1158, %v1216
        %v1218 = vpop.f32.mrf.mxu0
        %v1219 = vadd.f32 %v1160, %v1218
        %1220 = vmatmul.bf16.gmra.mxu0 %v1118
        %v1221 = vpop.f32.mrf.mxu0
        %v1222 = vadd.f32 %v1163, %v1221
        %v1223 = vpop.f32.mrf.mxu0
        %v1224 = vadd.f32 %v1165, %v1223
        %1225 = vmatmul.bf16.gmra.mxu0 %v1121
        %v1226 = vpop.f32.mrf.mxu0
        %v1227 = vadd.f32 %v1168, %v1226
        %v1228 = vpop.f32.mrf.mxu0
        %v1229 = vadd.f32 %v1170, %v1228
        %1230 = vmatmul.bf16.gmra.mxu0 %v1124
        %v1231 = vpop.f32.mrf.mxu0
        %v1232 = vadd.f32 %v1173, %v1231
        %v1233 = vpop.f32.mrf.mxu0
        %v1234 = vadd.f32 %v1175, %v1233
        %1235 = vmatmul.bf16.gmra.mxu0 %v1127
        %v1236 = vpop.f32.mrf.mxu0
        %v1237 = vadd.f32 %v1178, %v1236
        %v1238 = vpop.f32.mrf.mxu0
        %v1239 = vadd.f32 %v1180, %v1238
        %1240 = vmatmul.bf16.gmra.mxu0 %v1130
        %v1241 = vpop.f32.mrf.mxu0
        %v1242 = vadd.f32 %v1183, %v1241
        %v1243 = vpop.f32.mrf.mxu0
        %v1244 = vadd.f32 %v1185, %v1243
        %1245 = vmatmul.bf16.gmra.mxu0 %v1133
        %v1246 = vpop.f32.mrf.mxu0
        %v1247 = vadd.f32 %v1188, %v1246
        %v1248 = vpop.f32.mrf.mxu0
        %v1249 = vadd.f32 %v1190, %v1248
        %1250 = vmatmul.bf16.gmra.mxu0 %v1136
        %v1251 = vpop.f32.mrf.mxu0
        %v1252 = vadd.f32 %v1193, %v1251
        %v1253 = vpop.f32.mrf.mxu0
        %v1254 = vadd.f32 %v1195, %v1253
        %1255 = vdwg.mxu0
        %v1256 = vadd.f32 %v918, %v1207
        %v1257 = vadd.f32 %v920, %v1209
        %v1258 = vadd.f32 %v923, %v1212
        %v1259 = vadd.f32 %v925, %v1214
        %v1260 = vadd.f32 %v928, %v1217
        %v1261 = vadd.f32 %v930, %v1219
        %v1262 = vadd.f32 %v933, %v1222
        %v1263 = vadd.f32 %v935, %v1224
        %v1264 = vadd.f32 %v938, %v1227
        %v1265 = vadd.f32 %v940, %v1229
        %v1266 = vadd.f32 %v943, %v1232
        %v1267 = vadd.f32 %v945, %v1234
        %v1268 = vadd.f32 %v948, %v1237
        %v1269 = vadd.f32 %v950, %v1239
        %v1270 = vadd.f32 %v953, %v1242
        %v1271 = vadd.f32 %v955, %v1244
        %v1272 = vadd.f32 %v958, %v1247
        %v1273 = vadd.f32 %v960, %v1249
        %v1274 = vadd.f32 %v963, %v1252
        %v1275 = vadd.f32 %v965, %v1254
        %s1276 = sld [smem:[#allocation2]]
        %v1277 = vstv %s1276
        %v1278 = vadd.f32 %v1256, %v1277
        %v1279 = vadd.f32 %v1257, %v1277
        %v1280 = vadd.f32 %v1258, %v1277
        %v1281 = vadd.f32 %v1259, %v1277
        %v1282 = vadd.f32 %v1260, %v1277
        %v1283 = vadd.f32 %v1261, %v1277
        %v1284 = vadd.f32 %v1262, %v1277
        %v1285 = vadd.f32 %v1263, %v1277
        %v1286 = vadd.f32 %v1264, %v1277
        %v1287 = vadd.f32 %v1265, %v1277
        %v1288 = vadd.f32 %v1266, %v1277
        %v1289 = vadd.f32 %v1267, %v1277
        %v1290 = vadd.f32 %v1268, %v1277
        %v1291 = vadd.f32 %v1269, %v1277
        %v1292 = vadd.f32 %v1270, %v1277
        %v1293 = vadd.f32 %v1271, %v1277
        %v1294 = vadd.f32 %v1272, %v1277
        %v1295 = vadd.f32 %v1273, %v1277
        %v1296 = vadd.f32 %v1274, %v1277
        %v1297 = vadd.f32 %v1275, %v1277
        %1298 = vst.msk [vmem:[%s244] sm:$0xff] %vm580, %v1278
        %1299 = vst.msk [vmem:[%s244 + $0x8] sm:$0xff] %vm580, %v1279
        %1300 = vst.msk [vmem:[%s244 + $0x10] sm:$0xff] %vm580, %v1280
        %1301 = vst.msk [vmem:[%s244 + $0x18] sm:$0xff] %vm580, %v1281
        %1302 = vst.msk [vmem:[%s244 + $0x20] sm:$0xff] %vm580, %v1282
        %1303 = vst.msk [vmem:[%s244 + $0x28] sm:$0xff] %vm580, %v1283
        %1304 = vst.msk [vmem:[%s244 + $0x30] sm:$0xff] %vm580, %v1284
        %1305 = vst.msk [vmem:[%s244 + $0x38] sm:$0xff] %vm580, %v1285
        %1306 = vst.msk [vmem:[%s244 + $0x40] sm:$0xff] %vm580, %v1286
        %1307 = vst.msk [vmem:[%s244 + $0x48] sm:$0xff] %vm580, %v1287
        %1308 = vst.msk [vmem:[%s244 + $0x50] sm:$0xff] %vm580, %v1288
        %1309 = vst.msk [vmem:[%s244 + $0x58] sm:$0xff] %vm580, %v1289
        %1310 = vst.msk [vmem:[%s244 + $0x60] sm:$0xff] %vm580, %v1290
        %1311 = vst.msk [vmem:[%s244 + $0x68] sm:$0xff] %vm580, %v1291
        %1312 = vst.msk [vmem:[%s244 + $0x70] sm:$0xff] %vm580, %v1292
        %1313 = vst.msk [vmem:[%s244 + $0x78] sm:$0xff] %vm580, %v1293
        %1314 = vst.msk [vmem:[%s244 + $0x80] sm:$0xff] %vm580, %v1294
        %1315 = vst.msk [vmem:[%s244 + $0x88] sm:$0xff] %vm580, %v1295
        %1316 = vst.msk [vmem:[%s244 + $0x90] sm:$0xff] %vm580, %v1296
        %1317 = vst.msk [vmem:[%s244 + $0x98] sm:$0xff] %vm580, %v1297
        %s1318 = smul.u32 20, %s18
        %p1319 = scmp.lt.s32.totalorder %s1318, 39
        %s1320 = scalar_select %p1319, %s1318, 39
        %s1321 = smul.addr %s1320, 8
        %s1322 = scalar_lea.vmem %s5, %s1321
        // Predicated region
        $region45: #{tpu_custom_call.1} parent=39 // pred_check
          %p1323 = pneg %p146
        $region46: #{tpu_custom_call.1} parent=39 // pred_check_branch
          %1325 = sbr.rel (%p1323) target = $region48
        $region47: #{tpu_custom_call.1} parent=39 // pred_region
          %s1326 = smul.u32 20, %s18
        $region48: #{tpu_custom_call.1} parent=39 // pred_fallthru
          _
      $region40: #{tpu_custom_call.1} parent=5 // pred_fallthru
        _
      %p1327 = scmp.le.s32.totalorder 2, %s13
      // Predicated region
      $region49: #{tpu_custom_call.1} parent=5 // pred_check
        %p1328 = pneg %p1327
      $region50: #{tpu_custom_call.1} parent=5 // pred_check_branch
        %1330 = sbr.rel (%p1328) target = $region52
      $region51: #{tpu_custom_call.1} parent=5 // pred_region
        %s1331 = ssub.s32 %s13, 2
        // Predicated region
        $region53: #{tpu_custom_call.1} parent=51 // pred_check
          %p1332 = pneg %p152
        $region54: #{tpu_custom_call.1} parent=51 // pred_check_branch
          %1334 = sbr.rel (%p1332) target = $region56
        $region55: #{tpu_custom_call.1} parent=51 // pred_region
          %s1335 = smul.u32 20, %s19
          %p1336 = scmp.lt.s32.totalorder %s1335, 39
          %s1337 = scalar_select %p1336, %s1335, 39
          %s1338 = smul.addr %s1337, 8
          %s1339 = scalar_lea.vmem %s5, %s1338
        $region56: #{tpu_custom_call.1} parent=51 // pred_fallthru
          _
      $region52: #{tpu_custom_call.1} parent=5 // pred_fallthru
        _
    $region6: #{tpu_custom_call.1} parent=1 // loop_footer
      %s17 = sadd.s32 1, %s13
    $region7: #{tpu_custom_call.1} parent=1 // loop_footer_branch
      %12 = sbr.rel target = $region3
    $region8: #{tpu_custom_call.1} parent=1 // loop_exit
      _
    %1340 = vsyncpa [#allocation4], 1
    %s1341 = scalar_lea.sflag [#allocation4], 1
    %1342 = vsyncpa %s1341, 1

</llo_original>
